<compile_context>
chip_gen: v7x
topology: tpu7x:2x2x1
jax: 0.10.0
libtpu: 0.0.40
codegen_flags: <defaults>
</compile_context>

<pallas_src>
import functools

import jax
import jax.numpy as jnp
from jax.experimental import pallas as pl
from jax.experimental.pallas import tpu as pltpu


# ---------------------------------------------------------------------------
# Fused kernel: conv-as-matmul (transposed, lane-dense) + BN batch stats +
# BN affine + ReLU, all in a single VMEM-resident pass.
# ---------------------------------------------------------------------------
def _fused_conv_bn_relu_kernel(pt_ref, w_ref, g_ref, beta_ref, o_ref, *, eps, inv_m):
    # pt_ref : [K, M]    bf16   patches^T (K = Cin*k*k, M = N*Ho*Wo)
    # w_ref  : [Cout, K] bf16   conv weights, (Cin, kh, kw) flattened
    # g_ref  : [Cout, 1] f32    BN gamma
    # beta_ref:[Cout, 1] f32    BN beta
    # o_ref  : [Cout, M] f32    lane-dense output (M multiple of 128)
    conv = jnp.dot(w_ref[...], pt_ref[...],
                   preferred_element_type=jnp.float32)          # [Cout, M] f32 (MXU)
    mean = jnp.sum(conv, axis=-1, keepdims=True) * inv_m        # [Cout, 1]
    cen = conv - mean
    var = jnp.sum(cen * cen, axis=-1, keepdims=True) * inv_m    # biased, like PyTorch BN fwd
    scale = g_ref[...] * jax.lax.rsqrt(var + eps)               # rsqrt -> EUP
    # Conv bias is absorbed by the batch mean, so shift is just beta.
    o_ref[...] = jnp.maximum(cen * scale + beta_ref[...], 0.0)


# ---------------------------------------------------------------------------
# One Conv2d -> BatchNorm2d -> ReLU stage
# ---------------------------------------------------------------------------
def conv_bn_relu(x, weight, gamma, beta, *, kernel_size, stride, padding, eps=1e-5):
    N, Cin, H, W = x.shape
    Cout = weight.shape[0]
    k = kernel_size
    Ho = (H + 2 * padding - k) // stride + 1
    Wo = (W + 2 * padding - k) // stride + 1
    M = N * Ho * Wo
    K = Cin * k * k

    # --- im2col directly in the transposed [K, M] layout, bf16 (JAX glue) ---
    xp = jnp.pad(x, ((0, 0), (0, 0), (padding, padding), (padding, padding)))
    cols = []
    for i in range(k):
        for j in range(k):
            cols.append(xp[:, :, i:i + stride * Ho:stride, j:j + stride * Wo:stride])
    p = jnp.stack(cols, axis=2)                 # [N, Cin, k*k, Ho, Wo]
    p = p.transpose(1, 2, 0, 3, 4)              # [Cin, k*k, N, Ho, Wo]
    patches_t = p.reshape(K, M).astype(jnp.bfloat16)

    w2d = weight.reshape(Cout, K).astype(jnp.bfloat16)     # [Cout, K] (Cin,kh,kw) flattened
    g2 = gamma.reshape(Cout, 1).astype(jnp.float32)
    be2 = beta.reshape(Cout, 1).astype(jnp.float32)

    # Whole stage runs as one VMEM-resident grid step; check the footprint fits
    # comfortably under the v7x scoped-VMEM budget (double-buffered inputs).
    vmem_bytes = 2 * (K * M * 2 + Cout * K * 2 + 2 * Cout * 4 + Cout * M * 4) + (1 << 20)
    assert vmem_bytes < 24 * 1024 * 1024, (
        f"stage needs ~{vmem_bytes} B of VMEM; add M tiling for shapes this large")

    kernel = functools.partial(_fused_conv_bn_relu_kernel, eps=eps, inv_m=1.0 / M)
    out_t = pl.pallas_call(
        kernel,
        out_shape=jax.ShapeDtypeStruct((Cout, M), jnp.float32),
        grid_spec=pltpu.PrefetchScalarGridSpec(
            num_scalar_prefetch=0,
            grid=(1,),
            in_specs=[
                pl.BlockSpec((K, M), lambda i: (0, 0)),
                pl.BlockSpec((Cout, K), lambda i: (0, 0)),
                pl.BlockSpec((Cout, 1), lambda i: (0, 0)),
                pl.BlockSpec((Cout, 1), lambda i: (0, 0)),
            ],
            out_specs=pl.BlockSpec((Cout, M), lambda i: (0, 0)),
        ),
        compiler_params=pltpu.CompilerParams(
            dimension_semantics=("arbitrary",),
            vmem_limit_bytes=32 * 1024 * 1024,
        ),
    )(patches_t, w2d, g2, be2)

    # [Cout, M] -> NCHW
    return out_t.reshape(Cout, N, Ho, Wo).transpose(1, 0, 2, 3)


# ---------------------------------------------------------------------------
# block_mid_1 forward: (Conv -> BN -> ReLU) x 2
# (conv biases b1/b2 exist in params to mirror nn.Conv2d, but training-mode
#  BatchNorm absorbs them exactly, so they are not fed to the kernel.)
# ---------------------------------------------------------------------------
def block_mid_1_forward(x, params, *, kernel_size, stride, padding):
    y = conv_bn_relu(x, params["w1"], params["g1"], params["be1"],
                     kernel_size=kernel_size, stride=stride, padding=padding)
    y = conv_bn_relu(y, params["w2"], params["g2"], params["be2"],
                     kernel_size=kernel_size, stride=stride, padding=padding)
    return y


def init_params(key, in_channels, out_channels, kernel_size):
    ks = jax.random.split(key, 8)
    fan1 = in_channels * kernel_size ** 2
    fan2 = out_channels * kernel_size ** 2
    return {
        "w1": jax.random.normal(ks[0], (out_channels, in_channels, kernel_size, kernel_size),
                                jnp.float32) / jnp.sqrt(fan1),
        "b1": 0.1 * jax.random.normal(ks[1], (out_channels,), jnp.float32),
        "g1": 1.0 + 0.1 * jax.random.normal(ks[2], (out_channels,), jnp.float32),
        "be1": 0.1 * jax.random.normal(ks[3], (out_channels,), jnp.float32),
        "w2": jax.random.normal(ks[4], (out_channels, out_channels, kernel_size, kernel_size),
                                jnp.float32) / jnp.sqrt(fan2),
        "b2": 0.1 * jax.random.normal(ks[5], (out_channels,), jnp.float32),
        "g2": 1.0 + 0.1 * jax.random.normal(ks[6], (out_channels,), jnp.float32),
        "be2": 0.1 * jax.random.normal(ks[7], (out_channels,), jnp.float32),
    }


# ---------------------------------------------------------------------------
# Pure-JAX reference (mirrors the PyTorch module, INCLUDING the conv bias,
# which validates the bias-absorption optimization) for correctness checking.
# ---------------------------------------------------------------------------
def reference_forward(x, params, *, kernel_size, stride, padding, eps=1e-5):
    def stage(x, w, b, g, be):
        y = jax.lax.conv_general_dilated(
            x, w, window_strides=(stride, stride),
            padding=[(padding, padding), (padding, padding)],
            dimension_numbers=("NCHW", "OIHW", "NCHW"))
        y = y + b.reshape(1, -1, 1, 1)
        mean = jnp.mean(y, axis=(0, 2, 3), keepdims=True)
        var = jnp.var(y, axis=(0, 2, 3), keepdims=True)  # biased, like PyTorch BN fwd
        y = (y - mean) / jnp.sqrt(var + eps) * g.reshape(1, -1, 1, 1) + be.reshape(1, -1, 1, 1)
        return jnp.maximum(y, 0.0)

    y = stage(x, params["w1"], params["b1"], params["g1"], params["be1"])
    y = stage(y, params["w2"], params["b2"], params["g2"], params["be2"])
    return y


if __name__ == "__main__":
    in_channels, out_channels = 4, 8
    kernel_size, stride, padding = 3, 1, 1
    N, H, W = 2, 16, 16

    key = jax.random.PRNGKey(0)
    kx, kp = jax.random.split(key)
    x = jax.random.normal(kx, (N, in_channels, H, W), jnp.float32)
    params = init_params(kp, in_channels, out_channels, kernel_size)

    fwd = jax.jit(functools.partial(block_mid_1_forward, kernel_size=kernel_size,
                                    stride=stride, padding=padding))
    y = jax.block_until_ready(fwd(x, params))

    y_ref = reference_forward(x, params, kernel_size=kernel_size,
                              stride=stride, padding=padding)

    assert y.shape == (N, out_channels, H, W), y.shape
    assert bool(jnp.isfinite(y).all())
    # bf16 MXU inputs (f32 accumulation) => slightly relaxed elementwise check
    # plus a tight mean-error check.
    max_err = float(jnp.max(jnp.abs(y - y_ref)))
    mean_err = float(jnp.mean(jnp.abs(y - y_ref)))
    assert max_err < 1e-1 and mean_err < 1e-2, (max_err, mean_err)
    print("KERNEL_OK")
</pallas_src>

<mosaic_0001>
module attributes {stable_mosaic.version = 11 : i64} {
  func.func @_fused_conv_bn_relu_kernel(%arg0: i32, %arg1: memref<36x512xbf16, #tpu.memory_space<vmem>>, %arg2: memref<8x36xbf16, #tpu.memory_space<vmem>>, %arg3: memref<8x1xf32, #tpu.memory_space<vmem>>, %arg4: memref<8x1xf32, #tpu.memory_space<vmem>>, %arg5: memref<8x512xf32, #tpu.memory_space<vmem>>) attributes {dimension_semantics = [#tpu.dimension_semantics<arbitrary>], iteration_bounds = array<i64: 1>, scalar_prefetch = 0 : i64, scratch_operands = 0 : i64, tpu.core_type = #tpu.core_type<tc>, window_params = [{pipeline_mode = #tpu.pipeline_mode<synchronous>, transform_indices = @transform_0, window_bounds = array<i64: 36, 512>}, {pipeline_mode = #tpu.pipeline_mode<synchronous>, transform_indices = @transform_1, window_bounds = array<i64: 8, 36>}, {pipeline_mode = #tpu.pipeline_mode<synchronous>, transform_indices = @transform_2, window_bounds = array<i64: 8, 1>}, {pipeline_mode = #tpu.pipeline_mode<synchronous>, transform_indices = @transform_3, window_bounds = array<i64: 8, 1>}, {pipeline_mode = #tpu.pipeline_mode<synchronous>, transform_indices = @transform_4, window_bounds = array<i64: 8, 512>}]} {
    %c0 = arith.constant 0 : index
    %c0_0 = arith.constant 0 : index
    %0 = vector.load %arg2[%c0, %c0_0] : memref<8x36xbf16, #tpu.memory_space<vmem>>, vector<8x36xbf16>
    %c0_1 = arith.constant 0 : index
    %c0_2 = arith.constant 0 : index
    %1 = vector.load %arg1[%c0_1, %c0_2] : memref<36x512xbf16, #tpu.memory_space<vmem>>, vector<36x512xbf16>
    %cst = arith.constant dense<0.000000e+00> : vector<8x512xf32>
    %2 = tpu.matmul %0, %1, %cst {dimension_numbers = #tpu.dot_dimension_numbers<[1], [0], [0], [1], [0, 0, 1, 1], [], []>} : vector<8x36xbf16>, vector<36x512xbf16>, vector<8x512xf32> -> vector<8x512xf32>
    %cst_3 = arith.constant dense<0.000000e+00> : vector<8xf32>
    %3 = vector.multi_reduction <add>, %2, %cst_3 [1] : vector<8x512xf32> to vector<8xf32>
    %4 = vector.shape_cast %3 : vector<8xf32> to vector<8x1xf32>
    %cst_4 = arith.constant 0.001953125 : f32
    %5 = vector.broadcast %cst_4 : f32 to vector<8x1xf32>
    %6 = arith.mulf %4, %5 : vector<8x1xf32>
    %7 = vector.broadcast %6 : vector<8x1xf32> to vector<8x512xf32>
    %8 = arith.subf %2, %7 : vector<8x512xf32>
    %9 = arith.mulf %8, %8 : vector<8x512xf32>
    %cst_5 = arith.constant dense<0.000000e+00> : vector<8xf32>
    %10 = vector.multi_reduction <add>, %9, %cst_5 [1] : vector<8x512xf32> to vector<8xf32>
    %11 = vector.shape_cast %10 : vector<8xf32> to vector<8x1xf32>
    %cst_6 = arith.constant 0.001953125 : f32
    %12 = vector.broadcast %cst_6 : f32 to vector<8x1xf32>
    %13 = arith.mulf %11, %12 : vector<8x1xf32>
    %c0_7 = arith.constant 0 : index
    %c0_8 = arith.constant 0 : index
    %14 = vector.load %arg3[%c0_7, %c0_8] : memref<8x1xf32, #tpu.memory_space<vmem>>, vector<8x1xf32>
    %cst_9 = arith.constant 9.99999974E-6 : f32
    %15 = vector.broadcast %cst_9 : f32 to vector<8x1xf32>
    %16 = arith.addf %13, %15 : vector<8x1xf32>
    %17 = math.rsqrt %16 : vector<8x1xf32>
    %18 = arith.mulf %14, %17 : vector<8x1xf32>
    %19 = vector.broadcast %18 : vector<8x1xf32> to vector<8x512xf32>
    %20 = arith.mulf %8, %19 : vector<8x512xf32>
    %c0_10 = arith.constant 0 : index
    %c0_11 = arith.constant 0 : index
    %21 = vector.load %arg4[%c0_10, %c0_11] : memref<8x1xf32, #tpu.memory_space<vmem>>, vector<8x1xf32>
    %22 = vector.broadcast %21 : vector<8x1xf32> to vector<8x512xf32>
    %23 = arith.addf %20, %22 : vector<8x512xf32>
    %cst_12 = arith.constant 0.000000e+00 : f32
    %24 = vector.broadcast %cst_12 : f32 to vector<8x512xf32>
    %25 = arith.maximumf %23, %24 : vector<8x512xf32>
    %c0_13 = arith.constant 0 : index
    %c0_14 = arith.constant 0 : index
    %26 = vector.load %arg5[%c0_13, %c0_14] : memref<8x512xf32, #tpu.memory_space<vmem>>, vector<8x512xf32>
    tpu.vector_store %arg5[%c0_13, %c0_14], %25 {strides = array<i32>} : memref<8x512xf32, #tpu.memory_space<vmem>>, vector<8x512xf32>,
    return
  }
  func.func @transform_0(%arg0: i32) -> (i32, i32) {
    %c0_i32 = arith.constant 0 : i32
    %c0_i32_0 = arith.constant 0 : i32
    %c0_i32_1 = arith.constant 0 : i32
    return %c0_i32, %c0_i32_0 : i32, i32
  }
  func.func @transform_1(%arg0: i32) -> (i32, i32) {
    %c0_i32 = arith.constant 0 : i32
    %c0_i32_0 = arith.constant 0 : i32
    %c0_i32_1 = arith.constant 0 : i32
    return %c0_i32, %c0_i32_0 : i32, i32
  }
  func.func @transform_2(%arg0: i32) -> (i32, i32) {
    %c0_i32 = arith.constant 0 : i32
    %c0_i32_0 = arith.constant 0 : i32
    %c0_i32_1 = arith.constant 0 : i32
    return %c0_i32, %c0_i32_0 : i32, i32
  }
  func.func @transform_3(%arg0: i32) -> (i32, i32) {
    %c0_i32 = arith.constant 0 : i32
    %c0_i32_0 = arith.constant 0 : i32
    %c0_i32_1 = arith.constant 0 : i32
    return %c0_i32, %c0_i32_0 : i32, i32
  }
  func.func @transform_4(%arg0: i32) -> (i32, i32) {
    %c0_i32 = arith.constant 0 : i32
    %c0_i32_0 = arith.constant 0 : i32
    %c0_i32_1 = arith.constant 0 : i32
    return %c0_i32, %c0_i32_0 : i32, i32
  }
}

module attributes {stable_mosaic.version = 11 : i64} {
  func.func @_fused_conv_bn_relu_kernel(%arg0: i32, %arg1: memref<72x512xbf16, #tpu.memory_space<vmem>>, %arg2: memref<8x72xbf16, #tpu.memory_space<vmem>>, %arg3: memref<8x1xf32, #tpu.memory_space<vmem>>, %arg4: memref<8x1xf32, #tpu.memory_space<vmem>>, %arg5: memref<8x512xf32, #tpu.memory_space<vmem>>) attributes {dimension_semantics = [#tpu.dimension_semantics<arbitrary>], iteration_bounds = array<i64: 1>, scalar_prefetch = 0 : i64, scratch_operands = 0 : i64, tpu.core_type = #tpu.core_type<tc>, window_params = [{pipeline_mode = #tpu.pipeline_mode<synchronous>, transform_indices = @transform_0, window_bounds = array<i64: 72, 512>}, {pipeline_mode = #tpu.pipeline_mode<synchronous>, transform_indices = @transform_1, window_bounds = array<i64: 8, 72>}, {pipeline_mode = #tpu.pipeline_mode<synchronous>, transform_indices = @transform_2, window_bounds = array<i64: 8, 1>}, {pipeline_mode = #tpu.pipeline_mode<synchronous>, transform_indices = @transform_3, window_bounds = array<i64: 8, 1>}, {pipeline_mode = #tpu.pipeline_mode<synchronous>, transform_indices = @transform_4, window_bounds = array<i64: 8, 512>}]} {
    %c0 = arith.constant 0 : index
    %c0_0 = arith.constant 0 : index
    %0 = vector.load %arg2[%c0, %c0_0] : memref<8x72xbf16, #tpu.memory_space<vmem>>, vector<8x72xbf16>
    %c0_1 = arith.constant 0 : index
    %c0_2 = arith.constant 0 : index
    %1 = vector.load %arg1[%c0_1, %c0_2] : memref<72x512xbf16, #tpu.memory_space<vmem>>, vector<72x512xbf16>
    %cst = arith.constant dense<0.000000e+00> : vector<8x512xf32>
    %2 = tpu.matmul %0, %1, %cst {dimension_numbers = #tpu.dot_dimension_numbers<[1], [0], [0], [1], [0, 0, 1, 1], [], []>} : vector<8x72xbf16>, vector<72x512xbf16>, vector<8x512xf32> -> vector<8x512xf32>
    %cst_3 = arith.constant dense<0.000000e+00> : vector<8xf32>
    %3 = vector.multi_reduction <add>, %2, %cst_3 [1] : vector<8x512xf32> to vector<8xf32>
    %4 = vector.shape_cast %3 : vector<8xf32> to vector<8x1xf32>
    %cst_4 = arith.constant 0.001953125 : f32
    %5 = vector.broadcast %cst_4 : f32 to vector<8x1xf32>
    %6 = arith.mulf %4, %5 : vector<8x1xf32>
    %7 = vector.broadcast %6 : vector<8x1xf32> to vector<8x512xf32>
    %8 = arith.subf %2, %7 : vector<8x512xf32>
    %9 = arith.mulf %8, %8 : vector<8x512xf32>
    %cst_5 = arith.constant dense<0.000000e+00> : vector<8xf32>
    %10 = vector.multi_reduction <add>, %9, %cst_5 [1] : vector<8x512xf32> to vector<8xf32>
    %11 = vector.shape_cast %10 : vector<8xf32> to vector<8x1xf32>
    %cst_6 = arith.constant 0.001953125 : f32
    %12 = vector.broadcast %cst_6 : f32 to vector<8x1xf32>
    %13 = arith.mulf %11, %12 : vector<8x1xf32>
    %c0_7 = arith.constant 0 : index
    %c0_8 = arith.constant 0 : index
    %14 = vector.load %arg3[%c0_7, %c0_8] : memref<8x1xf32, #tpu.memory_space<vmem>>, vector<8x1xf32>
    %cst_9 = arith.constant 9.99999974E-6 : f32
    %15 = vector.broadcast %cst_9 : f32 to vector<8x1xf32>
    %16 = arith.addf %13, %15 : vector<8x1xf32>
    %17 = math.rsqrt %16 : vector<8x1xf32>
    %18 = arith.mulf %14, %17 : vector<8x1xf32>
    %19 = vector.broadcast %18 : vector<8x1xf32> to vector<8x512xf32>
    %20 = arith.mulf %8, %19 : vector<8x512xf32>
    %c0_10 = arith.constant 0 : index
    %c0_11 = arith.constant 0 : index
    %21 = vector.load %arg4[%c0_10, %c0_11] : memref<8x1xf32, #tpu.memory_space<vmem>>, vector<8x1xf32>
    %22 = vector.broadcast %21 : vector<8x1xf32> to vector<8x512xf32>
    %23 = arith.addf %20, %22 : vector<8x512xf32>
    %cst_12 = arith.constant 0.000000e+00 : f32
    %24 = vector.broadcast %cst_12 : f32 to vector<8x512xf32>
    %25 = arith.maximumf %23, %24 : vector<8x512xf32>
    %c0_13 = arith.constant 0 : index
    %c0_14 = arith.constant 0 : index
    %26 = vector.load %arg5[%c0_13, %c0_14] : memref<8x512xf32, #tpu.memory_space<vmem>>, vector<8x512xf32>
    tpu.vector_store %arg5[%c0_13, %c0_14], %25 {strides = array<i32>} : memref<8x512xf32, #tpu.memory_space<vmem>>, vector<8x512xf32>,
    return
  }
  func.func @transform_0(%arg0: i32) -> (i32, i32) {
    %c0_i32 = arith.constant 0 : i32
    %c0_i32_0 = arith.constant 0 : i32
    %c0_i32_1 = arith.constant 0 : i32
    return %c0_i32, %c0_i32_0 : i32, i32
  }
  func.func @transform_1(%arg0: i32) -> (i32, i32) {
    %c0_i32 = arith.constant 0 : i32
    %c0_i32_0 = arith.constant 0 : i32
    %c0_i32_1 = arith.constant 0 : i32
    return %c0_i32, %c0_i32_0 : i32, i32
  }
  func.func @transform_2(%arg0: i32) -> (i32, i32) {
    %c0_i32 = arith.constant 0 : i32
    %c0_i32_0 = arith.constant 0 : i32
    %c0_i32_1 = arith.constant 0 : i32
    return %c0_i32, %c0_i32_0 : i32, i32
  }
  func.func @transform_3(%arg0: i32) -> (i32, i32) {
    %c0_i32 = arith.constant 0 : i32
    %c0_i32_0 = arith.constant 0 : i32
    %c0_i32_1 = arith.constant 0 : i32
    return %c0_i32, %c0_i32_0 : i32, i32
  }
  func.func @transform_4(%arg0: i32) -> (i32, i32) {
    %c0_i32 = arith.constant 0 : i32
    %c0_i32_0 = arith.constant 0 : i32
    %c0_i32_1 = arith.constant 0 : i32
    return %c0_i32, %c0_i32_0 : i32, i32
  }
}

</mosaic_0001>

<llo_original>
// kernel: block_mid_1_forward.2
$region0: #{block_mid_1_forward.2}
  #allocation0 [shape = 'u32[]', space=smem, size = 0x4, offset = 0x4, fixed_abs, tag = 'smem constant byte address 0x4 - core index']
  #allocation1 [shape = 'u32[144,128]{1,0:T(1,128)}', space=vmem, size = 0x12000, scoped, tag = 'internal scratch']
  %s0 = inlined_call_operand.vmem [shape: bf16[36,512], index: 0, kind: input, shape index: {}]
  %s1 = inlined_call_operand.vmem [shape: bf16[8,36], index: 1, kind: input, shape index: {}]
  %s2 = inlined_call_operand.vmem [shape: f32[8,1], index: 2, kind: input, shape index: {}]
  %s3 = inlined_call_operand.vmem [shape: f32[8,1], index: 3, kind: input, shape index: {}]
  %s4 = inlined_call_operand.vmem [shape: f32[8,512], index: 4, kind: output, shape index: {}]
  %s5 = sld [smem:[#allocation0]]
  $region26: #{block_mid_1_forward.2} parent=0
    _
  %s7 = ssub.s32 1, %s5
  %s8 = scalar_select 0, %s7, %s5
  // Predicated region
  $region2: #{block_mid_1_forward.2} parent=0 // pred_check
    _
  $region3: #{block_mid_1_forward.2} parent=0 // pred_check_branch
    %10 = sbr.rel (0) target = $region5
  $region4: #{block_mid_1_forward.2} parent=0 // pred_region
    _
  $region5: #{block_mid_1_forward.2} parent=0 // pred_fallthru
    _
  // Predicated region
  $region6: #{block_mid_1_forward.2} parent=0 // pred_check
    _
  $region7: #{block_mid_1_forward.2} parent=0 // pred_check_branch
    %12 = sbr.rel (0) target = $region9
  $region8: #{block_mid_1_forward.2} parent=0 // pred_region
    _
  $region9: #{block_mid_1_forward.2} parent=0 // pred_fallthru
    _
  // Predicated region
  $region10: #{block_mid_1_forward.2} parent=0 // pred_check
    _
  $region11: #{block_mid_1_forward.2} parent=0 // pred_check_branch
    %14 = sbr.rel (0) target = $region13
  $region12: #{block_mid_1_forward.2} parent=0 // pred_region
    _
  $region13: #{block_mid_1_forward.2} parent=0 // pred_fallthru
    _
  // Predicated region
  $region14: #{block_mid_1_forward.2} parent=0 // pred_check
    _
  $region15: #{block_mid_1_forward.2} parent=0 // pred_check_branch
    %16 = sbr.rel (0) target = $region17
  $region16: #{block_mid_1_forward.2} parent=0 // pred_region
    _
  $region17: #{block_mid_1_forward.2} parent=0 // pred_fallthru
    _
  %v18 = vld [vmem:[%s1] sm:$0xf]
  %v19 = vld [vmem:[%s0] sm:$0xff]
  %v20 = vld [vmem:[%s0 + $0x8] sm:$0xff]
  %v21 = vld [vmem:[%s0 + $0x10] sm:$0xff]
  %v22 = vld [vmem:[%s0 + $0x18] sm:$0xff]
  %v23 = vld [vmem:[%s0 + $0x20] sm:$0xff]
  %v24 = vld [vmem:[%s0 + $0x28] sm:$0xff]
  %v25 = vld [vmem:[%s0 + $0x30] sm:$0xff]
  %v26 = vld [vmem:[%s0 + $0x38] sm:$0xff]
  %v27 = vld [vmem:[%s0 + $0x40] sm:$0x33]
  %v28 = vld [vmem:[%s0 + $0x48] sm:$0x33]
  %v39 = vunpack.c.l.b16 %v19
  %v40 = vunpack.c.h.b16 %v19
  %v41 = vunpack.c.l.b16 %v20
  %v42 = vunpack.c.h.b16 %v20
  %v43 = vunpack.c.l.b16 %v21
  %v44 = vunpack.c.h.b16 %v21
  %v45 = vunpack.c.l.b16 %v22
  %v46 = vunpack.c.h.b16 %v22
  %v47 = vunpack.c.l.b16 %v23
  %v48 = vunpack.c.h.b16 %v23
  %v49 = vunpack.c.l.b16 %v24
  %v50 = vunpack.c.h.b16 %v24
  %v51 = vunpack.c.l.b16 %v25
  %v52 = vunpack.c.h.b16 %v25
  %v53 = vunpack.c.l.b16 %v26
  %v54 = vunpack.c.h.b16 %v26
  %v55 = vunpack.c.l.b16 %v27
  %v56 = vunpack.c.h.b16 %v27
  %v57 = vunpack.c.l.b16 %v28
  %v58 = vunpack.c.h.b16 %v28
  %v59 = vpack.c.b16 %v43, %v39
  %v60 = vpack.c.b16 %v44, %v40
  %v61 = vpack.c.b16 %v45, %v41
  %v62 = vpack.c.b16 %v46, %v42
  %v63 = vpack.c.b16 %v51, %v47
  %v64 = vpack.c.b16 %v52, %v48
  %v65 = vpack.c.b16 %v53, %v49
  %v66 = vpack.c.b16 %v54, %v50
  %v67 = vpack.c.b16 %v55, %v55
  %v68 = vpack.c.b16 %v56, %v56
  %v69 = vpack.c.b16 %v57, %v57
  %v70 = vpack.c.b16 %v58, %v58
  %vm79 = vcmask 293888
  %v81 = vsel %vm79, %v18, 0
  %vm83 = vcmask 1041408
  %v85 = vsel %vm83, %v67, 0
  %v88 = vsel %vm83, %v68, 0
  %v91 = vsel %vm83, %v69, 0
  %v94 = vsel %vm83, %v70, 0
  %96 = vmatprep.subr.bf16.mxu0 %v60
  %97 = vmatpush1.bf16.msra.mxu0 %v59
  %98 = vmatprep.subr.bf16.mxu0 %v64
  %99 = vmatpush1.bf16.msra.mxu0 %v63
  %100 = vmatprep.subr.bf16.mxu0 %v88
  %101 = vmatpush1.bf16.msra.mxu0 %v85
  %102 = vmatprep.subr.bf16.mxu0 0
  %103 = vmatpush1.bf16.msra.mxu0 0
  %104 = vmatprep.subr.bf16.mxu0 0
  %105 = vmatpush1.bf16.msra.mxu0 0
  %106 = vmatprep.subr.bf16.mxu0 0
  %107 = vmatpush1.bf16.msra.mxu0 0
  %108 = vmatprep.subr.bf16.mxu0 0
  %109 = vmatpush1.bf16.msra.mxu0 0
  %110 = vmatprep.subr.bf16.mxu0 0
  %111 = vmatpush1.bf16.msra.mxu0 0
  %112 = vmatprep.subr.bf16.mxu0 0
  %113 = vmatpush1.bf16.msra.mxu0 0
  %114 = vmatprep.subr.bf16.mxu0 0
  %115 = vmatpush1.bf16.msra.mxu0 0
  %116 = vmatprep.subr.bf16.mxu0 0
  %117 = vmatpush1.bf16.msra.mxu0 0
  %118 = vmatprep.subr.bf16.mxu0 0
  %119 = vmatpush1.bf16.msra.mxu0 0
  %120 = vmatprep.subr.bf16.mxu0 0
  %121 = vmatpush1.bf16.msra.mxu0 0
  %122 = vmatprep.subr.bf16.mxu0 0
  %123 = vmatpush1.bf16.msra.mxu0 0
  %124 = vmatprep.subr.bf16.mxu0 0
  %125 = vmatpush1.bf16.msra.mxu0 0
  %126 = vmatprep.subr.bf16.mxu0 0
  %127 = vmatpush1.bf16.msra.mxu0 0
  %128 = vmatprep.mubr.bf16.mxu0 0
  %129 = vmatmul.mubr.bf16.gmra.mrb[0].mxu0 %v81
  %v130 = vpop.f32.mrb[0].mxu0
  %v131 = vadd.f32 0.0, %v130
  %v132 = vpop.f32.mrb[0].mxu0
  %v133 = vadd.f32 0.0, %v132
  %v134 = vpop.f32.mrb[0].mxu0
  %v135 = vpop.f32.mrb[0].mxu0
  %136 = vdwg.mxu0
  %137 = vmatprep.subr.bf16.mxu0 %v62
  %138 = vmatpush1.bf16.msra.mxu0 %v61
  %139 = vmatprep.subr.bf16.mxu0 %v66
  %140 = vmatpush1.bf16.msra.mxu0 %v65
  %141 = vmatprep.subr.bf16.mxu0 %v94
  %142 = vmatpush1.bf16.msra.mxu0 %v91
  %143 = vmatprep.subr.bf16.mxu0 0
  %144 = vmatpush1.bf16.msra.mxu0 0
  %145 = vmatprep.subr.bf16.mxu0 0
  %146 = vmatpush1.bf16.msra.mxu0 0
  %147 = vmatprep.subr.bf16.mxu0 0
  %148 = vmatpush1.bf16.msra.mxu0 0
  %149 = vmatprep.subr.bf16.mxu0 0
  %150 = vmatpush1.bf16.msra.mxu0 0
  %151 = vmatprep.subr.bf16.mxu0 0
  %152 = vmatpush1.bf16.msra.mxu0 0
  %153 = vmatprep.subr.bf16.mxu0 0
  %154 = vmatpush1.bf16.msra.mxu0 0
  %155 = vmatprep.subr.bf16.mxu0 0
  %156 = vmatpush1.bf16.msra.mxu0 0
  %157 = vmatprep.subr.bf16.mxu0 0
  %158 = vmatpush1.bf16.msra.mxu0 0
  %159 = vmatprep.subr.bf16.mxu0 0
  %160 = vmatpush1.bf16.msra.mxu0 0
  %161 = vmatprep.subr.bf16.mxu0 0
  %162 = vmatpush1.bf16.msra.mxu0 0
  %163 = vmatprep.subr.bf16.mxu0 0
  %164 = vmatpush1.bf16.msra.mxu0 0
  %165 = vmatprep.subr.bf16.mxu0 0
  %166 = vmatpush1.bf16.msra.mxu0 0
  %167 = vmatprep.subr.bf16.mxu0 0
  %168 = vmatpush1.bf16.msra.mxu0 0
  %169 = vmatprep.mubr.bf16.mxu0 0
  %170 = vmatmul.mubr.bf16.gmra.mrb[0].mxu0 %v81
  %v171 = vpop.f32.mrb[0].mxu0
  %v172 = vadd.f32 0.0, %v171
  %v173 = vpop.f32.mrb[0].mxu0
  %v174 = vadd.f32 0.0, %v173
  %v175 = vpop.f32.mrb[0].mxu0
  %v176 = vpop.f32.mrb[0].mxu0
  %177 = vdwg.mxu0
  %v178 = vadd.f32 %v131, %v133
  %v179 = vadd.f32 %v178, %v172
  %v180 = vadd.f32 %v179, %v174
  %181 = vadd.xlane.f32.xlu0 %v180
  %v182 = vpop.xlane.xlu0 %181
  %v183 = vmul.f32 %v182, 0.001953125
  %v184 = vsub.f32 %v131, %v183
  %v185 = vsub.f32 %v133, %v183
  %v186 = vsub.f32 %v172, %v183
  %v187 = vsub.f32 %v174, %v183
  %v188 = vmul.f32 %v184, %v184
  %v189 = vmul.f32 %v185, %v185
  %v190 = vmul.f32 %v186, %v186
  %v191 = vmul.f32 %v187, %v187
  %v192 = vadd.f32 %v188, %v189
  %v193 = vadd.f32 %v192, %v190
  %v194 = vadd.f32 %v193, %v191
  %195 = vadd.xlane.f32.xlu0 %v194
  %v196 = vpop.xlane.xlu0 %195
  %v197 = vmul.f32 %v196, 0.001953125
  %v198 = vld [vmem:[%s2] sm:$0xff]
  %v199 = vadd.f32 %v197, 1e-05
  %v200 = vrsqrt.pop %v199
  %v201 = vmul.f32 %v198, %v200
  %203 = vset.pattern.permute.xlu0 0
  %204 = vperm.xlu0 %203, %v201
  %v205 = vpop.permute.xlu0 %204
  %v207 = vmul.f32 %v184, %v205
  %v208 = vmul.f32 %v185, %v205
  %v209 = vmul.f32 %v186, %v205
  %v210 = vmul.f32 %v187, %v205
  %v211 = vld [vmem:[%s3] sm:$0xff]
  %213 = vset.pattern.permute.xlu0 0
  %214 = vperm.xlu0 %213, %v211
  %v215 = vpop.permute.xlu0 %214
  %v217 = vadd.f32 %v207, %v215
  %v218 = vadd.f32 %v208, %v215
  %v219 = vadd.f32 %v209, %v215
  %v220 = vadd.f32 %v210, %v215
  %v221 = vmax.f32 %v217, 0.0
  %v222 = vmax.f32 %v218, 0.0
  %v223 = vmax.f32 %v219, 0.0
  %v224 = vmax.f32 %v220, 0.0
  %225 = vst [vmem:[%s4] sm:$0xff] %v221
  %226 = vst [vmem:[%s4 + $0x8] sm:$0xff] %v222
  %227 = vst [vmem:[%s4 + $0x10] sm:$0xff] %v223
  %228 = vst [vmem:[%s4 + $0x18] sm:$0xff] %v224
  // Predicated region
  $region18: #{block_mid_1_forward.2} parent=0 // pred_check
    _
  $region19: #{block_mid_1_forward.2} parent=0 // pred_check_branch
    %230 = sbr.rel (0) target = $region21
  $region20: #{block_mid_1_forward.2} parent=0 // pred_region
    _
  $region21: #{block_mid_1_forward.2} parent=0 // pred_fallthru
    _
  // Predicated region
  $region22: #{block_mid_1_forward.2} parent=0 // pred_check
    _
  $region23: #{block_mid_1_forward.2} parent=0 // pred_check_branch
    %232 = sbr.rel (0) target = $region25
  $region24: #{block_mid_1_forward.2} parent=0 // pred_region
    _
  $region25: #{block_mid_1_forward.2} parent=0 // pred_fallthru
    _

// kernel: block_mid_1_forward.3
$region0: #{block_mid_1_forward.3}
  #allocation0 [shape = 'u32[]', space=smem, size = 0x4, offset = 0x4, fixed_abs, tag = 'smem constant byte address 0x4 - core index']
  #allocation1 [shape = 'u32[144,128]{1,0:T(1,128)}', space=vmem, size = 0x12000, scoped, tag = 'internal scratch']
  %s0 = inlined_call_operand.vmem [shape: bf16[72,512], index: 0, kind: input, shape index: {}]
  %s1 = inlined_call_operand.vmem [shape: bf16[8,72], index: 1, kind: input, shape index: {}]
  %s2 = inlined_call_operand.vmem [shape: f32[8,1], index: 2, kind: input, shape index: {}]
  %s3 = inlined_call_operand.vmem [shape: f32[8,1], index: 3, kind: input, shape index: {}]
  %s4 = inlined_call_operand.vmem [shape: f32[8,512], index: 4, kind: output, shape index: {}]
  %s5 = sld [smem:[#allocation0]]
  $region26: #{block_mid_1_forward.3} parent=0
    _
  %s7 = ssub.s32 1, %s5
  %s8 = scalar_select 0, %s7, %s5
  // Predicated region
  $region2: #{block_mid_1_forward.3} parent=0 // pred_check
    _
  $region3: #{block_mid_1_forward.3} parent=0 // pred_check_branch
    %10 = sbr.rel (0) target = $region5
  $region4: #{block_mid_1_forward.3} parent=0 // pred_region
    _
  $region5: #{block_mid_1_forward.3} parent=0 // pred_fallthru
    _
  // Predicated region
  $region6: #{block_mid_1_forward.3} parent=0 // pred_check
    _
  $region7: #{block_mid_1_forward.3} parent=0 // pred_check_branch
    %12 = sbr.rel (0) target = $region9
  $region8: #{block_mid_1_forward.3} parent=0 // pred_region
    _
  $region9: #{block_mid_1_forward.3} parent=0 // pred_fallthru
    _
  // Predicated region
  $region10: #{block_mid_1_forward.3} parent=0 // pred_check
    _
  $region11: #{block_mid_1_forward.3} parent=0 // pred_check_branch
    %14 = sbr.rel (0) target = $region13
  $region12: #{block_mid_1_forward.3} parent=0 // pred_region
    _
  $region13: #{block_mid_1_forward.3} parent=0 // pred_fallthru
    _
  // Predicated region
  $region14: #{block_mid_1_forward.3} parent=0 // pred_check
    _
  $region15: #{block_mid_1_forward.3} parent=0 // pred_check_branch
    %16 = sbr.rel (0) target = $region17
  $region16: #{block_mid_1_forward.3} parent=0 // pred_region
    _
  $region17: #{block_mid_1_forward.3} parent=0 // pred_fallthru
    _
  %v18 = vld [vmem:[%s1] sm:$0xf]
  %v19 = vld [vmem:[%s0] sm:$0xff]
  %v20 = vld [vmem:[%s0 + $0x8] sm:$0xff]
  %v21 = vld [vmem:[%s0 + $0x10] sm:$0xff]
  %v22 = vld [vmem:[%s0 + $0x18] sm:$0xff]
  %v23 = vld [vmem:[%s0 + $0x20] sm:$0xff]
  %v24 = vld [vmem:[%s0 + $0x28] sm:$0xff]
  %v25 = vld [vmem:[%s0 + $0x30] sm:$0xff]
  %v26 = vld [vmem:[%s0 + $0x38] sm:$0xff]
  %v27 = vld [vmem:[%s0 + $0x40] sm:$0xff]
  %v28 = vld [vmem:[%s0 + $0x48] sm:$0xff]
  %v29 = vld [vmem:[%s0 + $0x50] sm:$0xff]
  %v30 = vld [vmem:[%s0 + $0x58] sm:$0xff]
  %v31 = vld [vmem:[%s0 + $0x60] sm:$0xff]
  %v32 = vld [vmem:[%s0 + $0x68] sm:$0xff]
  %v33 = vld [vmem:[%s0 + $0x70] sm:$0xff]
  %v34 = vld [vmem:[%s0 + $0x78] sm:$0xff]
  %v35 = vld [vmem:[%s0 + $0x80] sm:$0xff]
  %v36 = vld [vmem:[%s0 + $0x88] sm:$0xff]
  %v55 = vunpack.c.l.b16 %v19
  %v56 = vunpack.c.h.b16 %v19
  %v57 = vunpack.c.l.b16 %v20
  %v58 = vunpack.c.h.b16 %v20
  %v59 = vunpack.c.l.b16 %v21
  %v60 = vunpack.c.h.b16 %v21
  %v61 = vunpack.c.l.b16 %v22
  %v62 = vunpack.c.h.b16 %v22
  %v63 = vunpack.c.l.b16 %v23
  %v64 = vunpack.c.h.b16 %v23
  %v65 = vunpack.c.l.b16 %v24
  %v66 = vunpack.c.h.b16 %v24
  %v67 = vunpack.c.l.b16 %v25
  %v68 = vunpack.c.h.b16 %v25
  %v69 = vunpack.c.l.b16 %v26
  %v70 = vunpack.c.h.b16 %v26
  %v71 = vunpack.c.l.b16 %v27
  %v72 = vunpack.c.h.b16 %v27
  %v73 = vunpack.c.l.b16 %v28
  %v74 = vunpack.c.h.b16 %v28
  %v75 = vunpack.c.l.b16 %v29
  %v76 = vunpack.c.h.b16 %v29
  %v77 = vunpack.c.l.b16 %v30
  %v78 = vunpack.c.h.b16 %v30
  %v79 = vunpack.c.l.b16 %v31
  %v80 = vunpack.c.h.b16 %v31
  %v81 = vunpack.c.l.b16 %v32
  %v82 = vunpack.c.h.b16 %v32
  %v83 = vunpack.c.l.b16 %v33
  %v84 = vunpack.c.h.b16 %v33
  %v85 = vunpack.c.l.b16 %v34
  %v86 = vunpack.c.h.b16 %v34
  %v87 = vunpack.c.l.b16 %v35
  %v88 = vunpack.c.h.b16 %v35
  %v89 = vunpack.c.l.b16 %v36
  %v90 = vunpack.c.h.b16 %v36
  %v91 = vpack.c.b16 %v59, %v55
  %v92 = vpack.c.b16 %v60, %v56
  %v93 = vpack.c.b16 %v61, %v57
  %v94 = vpack.c.b16 %v62, %v58
  %v95 = vpack.c.b16 %v67, %v63
  %v96 = vpack.c.b16 %v68, %v64
  %v97 = vpack.c.b16 %v69, %v65
  %v98 = vpack.c.b16 %v70, %v66
  %v99 = vpack.c.b16 %v75, %v71
  %v100 = vpack.c.b16 %v76, %v72
  %v101 = vpack.c.b16 %v77, %v73
  %v102 = vpack.c.b16 %v78, %v74
  %v103 = vpack.c.b16 %v83, %v79
  %v104 = vpack.c.b16 %v84, %v80
  %v105 = vpack.c.b16 %v85, %v81
  %v106 = vpack.c.b16 %v86, %v82
  %v107 = vpack.c.b16 %v87, %v87
  %v108 = vpack.c.b16 %v88, %v88
  %v109 = vpack.c.b16 %v89, %v89
  %v110 = vpack.c.b16 %v90, %v90
  %vm127 = vcmask 588800
  %v129 = vsel %vm127, %v18, 0
  %vm131 = vcmask 1043456
  %v133 = vsel %vm131, %v107, 0
  %v136 = vsel %vm131, %v108, 0
  %v139 = vsel %vm131, %v109, 0
  %v142 = vsel %vm131, %v110, 0
  %144 = vmatprep.subr.bf16.mxu0 %v92
  %145 = vmatpush1.bf16.msra.mxu0 %v91
  %146 = vmatprep.subr.bf16.mxu0 %v96
  %147 = vmatpush1.bf16.msra.mxu0 %v95
  %148 = vmatprep.subr.bf16.mxu0 %v100
  %149 = vmatpush1.bf16.msra.mxu0 %v99
  %150 = vmatprep.subr.bf16.mxu0 %v104
  %151 = vmatpush1.bf16.msra.mxu0 %v103
  %152 = vmatprep.subr.bf16.mxu0 %v136
  %153 = vmatpush1.bf16.msra.mxu0 %v133
  %154 = vmatprep.subr.bf16.mxu0 0
  %155 = vmatpush1.bf16.msra.mxu0 0
  %156 = vmatprep.subr.bf16.mxu0 0
  %157 = vmatpush1.bf16.msra.mxu0 0
  %158 = vmatprep.subr.bf16.mxu0 0
  %159 = vmatpush1.bf16.msra.mxu0 0
  %160 = vmatprep.subr.bf16.mxu0 0
  %161 = vmatpush1.bf16.msra.mxu0 0
  %162 = vmatprep.subr.bf16.mxu0 0
  %163 = vmatpush1.bf16.msra.mxu0 0
  %164 = vmatprep.subr.bf16.mxu0 0
  %165 = vmatpush1.bf16.msra.mxu0 0
  %166 = vmatprep.subr.bf16.mxu0 0
  %167 = vmatpush1.bf16.msra.mxu0 0
  %168 = vmatprep.subr.bf16.mxu0 0
  %169 = vmatpush1.bf16.msra.mxu0 0
  %170 = vmatprep.subr.bf16.mxu0 0
  %171 = vmatpush1.bf16.msra.mxu0 0
  %172 = vmatprep.subr.bf16.mxu0 0
  %173 = vmatpush1.bf16.msra.mxu0 0
  %174 = vmatprep.subr.bf16.mxu0 0
  %175 = vmatpush1.bf16.msra.mxu0 0
  %176 = vmatprep.mubr.bf16.mxu0 0
  %177 = vmatmul.mubr.bf16.gmra.mrb[0].mxu0 %v129
  %v178 = vpop.f32.mrb[0].mxu0
  %v179 = vadd.f32 0.0, %v178
  %v180 = vpop.f32.mrb[0].mxu0
  %v181 = vadd.f32 0.0, %v180
  %v182 = vpop.f32.mrb[0].mxu0
  %v183 = vpop.f32.mrb[0].mxu0
  %184 = vdwg.mxu0
  %185 = vmatprep.subr.bf16.mxu0 %v94
  %186 = vmatpush1.bf16.msra.mxu0 %v93
  %187 = vmatprep.subr.bf16.mxu0 %v98
  %188 = vmatpush1.bf16.msra.mxu0 %v97
  %189 = vmatprep.subr.bf16.mxu0 %v102
  %190 = vmatpush1.bf16.msra.mxu0 %v101
  %191 = vmatprep.subr.bf16.mxu0 %v106
  %192 = vmatpush1.bf16.msra.mxu0 %v105
  %193 = vmatprep.subr.bf16.mxu0 %v142
  %194 = vmatpush1.bf16.msra.mxu0 %v139
  %195 = vmatprep.subr.bf16.mxu0 0
  %196 = vmatpush1.bf16.msra.mxu0 0
  %197 = vmatprep.subr.bf16.mxu0 0
  %198 = vmatpush1.bf16.msra.mxu0 0
  %199 = vmatprep.subr.bf16.mxu0 0
  %200 = vmatpush1.bf16.msra.mxu0 0
  %201 = vmatprep.subr.bf16.mxu0 0
  %202 = vmatpush1.bf16.msra.mxu0 0
  %203 = vmatprep.subr.bf16.mxu0 0
  %204 = vmatpush1.bf16.msra.mxu0 0
  %205 = vmatprep.subr.bf16.mxu0 0
  %206 = vmatpush1.bf16.msra.mxu0 0
  %207 = vmatprep.subr.bf16.mxu0 0
  %208 = vmatpush1.bf16.msra.mxu0 0
  %209 = vmatprep.subr.bf16.mxu0 0
  %210 = vmatpush1.bf16.msra.mxu0 0
  %211 = vmatprep.subr.bf16.mxu0 0
  %212 = vmatpush1.bf16.msra.mxu0 0
  %213 = vmatprep.subr.bf16.mxu0 0
  %214 = vmatpush1.bf16.msra.mxu0 0
  %215 = vmatprep.subr.bf16.mxu0 0
  %216 = vmatpush1.bf16.msra.mxu0 0
  %217 = vmatprep.mubr.bf16.mxu0 0
  %218 = vmatmul.mubr.bf16.gmra.mrb[0].mxu0 %v129
  %v219 = vpop.f32.mrb[0].mxu0
  %v220 = vadd.f32 0.0, %v219
  %v221 = vpop.f32.mrb[0].mxu0
  %v222 = vadd.f32 0.0, %v221
  %v223 = vpop.f32.mrb[0].mxu0
  %v224 = vpop.f32.mrb[0].mxu0
  %225 = vdwg.mxu0
  %v226 = vadd.f32 %v179, %v181
  %v227 = vadd.f32 %v226, %v220
  %v228 = vadd.f32 %v227, %v222
  %229 = vadd.xlane.f32.xlu0 %v228
  %v230 = vpop.xlane.xlu0 %229
  %v231 = vmul.f32 %v230, 0.001953125
  %v232 = vsub.f32 %v179, %v231
  %v233 = vsub.f32 %v181, %v231
  %v234 = vsub.f32 %v220, %v231
  %v235 = vsub.f32 %v222, %v231
  %v236 = vmul.f32 %v232, %v232
  %v237 = vmul.f32 %v233, %v233
  %v238 = vmul.f32 %v234, %v234
  %v239 = vmul.f32 %v235, %v235
  %v240 = vadd.f32 %v236, %v237
  %v241 = vadd.f32 %v240, %v238
  %v242 = vadd.f32 %v241, %v239
  %243 = vadd.xlane.f32.xlu0 %v242
  %v244 = vpop.xlane.xlu0 %243
  %v245 = vmul.f32 %v244, 0.001953125
  %v246 = vld [vmem:[%s2] sm:$0xff]
  %v247 = vadd.f32 %v245, 1e-05
  %v248 = vrsqrt.pop %v247
  %v249 = vmul.f32 %v246, %v248
  %251 = vset.pattern.permute.xlu0 0
  %252 = vperm.xlu0 %251, %v249
  %v253 = vpop.permute.xlu0 %252
  %v255 = vmul.f32 %v232, %v253
  %v256 = vmul.f32 %v233, %v253
  %v257 = vmul.f32 %v234, %v253
  %v258 = vmul.f32 %v235, %v253
  %v259 = vld [vmem:[%s3] sm:$0xff]
  %261 = vset.pattern.permute.xlu0 0
  %262 = vperm.xlu0 %261, %v259
  %v263 = vpop.permute.xlu0 %262
  %v265 = vadd.f32 %v255, %v263
  %v266 = vadd.f32 %v256, %v263
  %v267 = vadd.f32 %v257, %v263
  %v268 = vadd.f32 %v258, %v263
  %v269 = vmax.f32 %v265, 0.0
  %v270 = vmax.f32 %v266, 0.0
  %v271 = vmax.f32 %v267, 0.0
  %v272 = vmax.f32 %v268, 0.0
  %273 = vst [vmem:[%s4] sm:$0xff] %v269
  %274 = vst [vmem:[%s4 + $0x8] sm:$0xff] %v270
  %275 = vst [vmem:[%s4 + $0x10] sm:$0xff] %v271
  %276 = vst [vmem:[%s4 + $0x18] sm:$0xff] %v272
  // Predicated region
  $region18: #{block_mid_1_forward.3} parent=0 // pred_check
    _
  $region19: #{block_mid_1_forward.3} parent=0 // pred_check_branch
    %278 = sbr.rel (0) target = $region21
  $region20: #{block_mid_1_forward.3} parent=0 // pred_region
    _
  $region21: #{block_mid_1_forward.3} parent=0 // pred_fallthru
    _
  // Predicated region
  $region22: #{block_mid_1_forward.3} parent=0 // pred_check
    _
  $region23: #{block_mid_1_forward.3} parent=0 // pred_check_branch
    %280 = sbr.rel (0) target = $region25
  $region24: #{block_mid_1_forward.3} parent=0 // pred_region
    _
  $region25: #{block_mid_1_forward.3} parent=0 // pred_fallthru
    _

</llo_original>
